<compile_context>
chip_gen: v7x
topology: tpu7x:2x2x1
jax: 0.10.0
libtpu: 0.0.40
codegen_flags: <defaults>
</compile_context>

<pallas_src>
import math

import jax
import jax.numpy as jnp
from jax.experimental import pallas as pl
from jax.experimental.pallas import tpu as pltpu


def _round_up(a: int, b: int) -> int:
    return ((a + b - 1) // b) * b


def _tpu_block_params():
    """Generation-aware tiling knobs.

    v7x  (<=64 MiB VMEM/TC, 2 TCs, ~3.2 TB/s HBM): 8 MiB blocks, split >= 2 ways.
    v5e/v6e (128 MiB VMEM, 1 TC):                  4 MiB blocks, no forced split.
    """
    try:
        vmem_cap = int(pltpu.get_tpu_info().vmem_capacity_bytes)
    except Exception:
        vmem_cap = 128 * 1024 * 1024
    if vmem_cap <= 64 * 1024 * 1024:
        block_bytes, min_grid = 8 * 1024 * 1024, 2
    else:
        block_bytes, min_grid = 4 * 1024 * 1024, 1
    # Live set = (in + out) double-buffered = 4 * block, plus a little slack.
    vmem_limit = 4 * block_bytes + 4 * 1024 * 1024
    return block_bytes, min_grid, vmem_limit


_BLOCK_BYTES, _MIN_GRID, _VMEM_LIMIT = _tpu_block_params()
_PAD_LANES = 1024  # lane-dense fallback width for odd-sized tensors


def _hard_swish_kernel(x_ref, o_ref):
    # swish(x) = x * relu6(x + 3) / 6  (hard-swish).  Compute in f32 (cheap on
    # the VPU; the kernel is HBM-bandwidth bound) and cast back at the store.
    x = x_ref[...].astype(jnp.float32)
    y = x * (jnp.clip(x + 3.0, 0.0, 6.0) * (1.0 / 6.0))
    o_ref[...] = y.astype(o_ref.dtype)


def _pick_tile_rows(rows: int, lanes: int, itemsize: int, sublane: int) -> int:
    """Byte-budgeted row tile, sublane-aligned, split for megacore when useful."""
    budget_rows = max(
        sublane, (_BLOCK_BYTES // (lanes * itemsize)) // sublane * sublane
    )
    if _MIN_GRID > 1:
        split_rows = max(sublane, _round_up(pl.cdiv(rows, _MIN_GRID), sublane))
        budget_rows = min(budget_rows, split_rows)
    if rows <= budget_rows:
        return rows          # single full-extent block (always layout-legal)
    return budget_rows       # multiple of sublane; ragged last block is masked


def _call_pallas(x2d, tile_rows: int, lanes: int, io_alias):
    rows = x2d.shape[0]
    return pl.pallas_call(
        _hard_swish_kernel,
        out_shape=jax.ShapeDtypeStruct(x2d.shape, x2d.dtype),
        grid=(pl.cdiv(rows, tile_rows),),
        in_specs=[pl.BlockSpec((tile_rows, lanes), lambda i: (i, 0))],
        out_specs=pl.BlockSpec((tile_rows, lanes), lambda i: (i, 0)),
        input_output_aliases=io_alias,
        compiler_params=pltpu.CompilerParams(
            dimension_semantics=("parallel",),
            vmem_limit_bytes=_VMEM_LIMIT,
        ),
    )(x2d)


@jax.jit
def hard_swish(x: jax.Array) -> jax.Array:
    """x * relu6(x+3)/6 elementwise. Any shape / float dtype (NCHW in DAHNET)."""
    orig_shape = x.shape
    total = int(math.prod(orig_shape))
    if total == 0:
        return x
    itemsize = jnp.dtype(x.dtype).itemsize
    sublane = max(8, 32 // itemsize)  # packed rows: 8 f32 / 16 bf16 / 32 int8

    # Fast path: a 128-multiple lane width that divides the element count
    # exactly -> pure reshape in, pure reshape out, zero extra HBM traffic.
    lanes = next((c for c in (1024, 512, 256, 128) if total % c == 0), None)
    if lanes is not None:
        rows = total // lanes
        tile_rows = _pick_tile_rows(rows, lanes, itemsize, sublane)
        out2d = _call_pallas(x.reshape(rows, lanes), tile_rows, lanes, {})
        return out2d.reshape(orig_shape)

    # Odd-size fallback: pad the flat tensor into a (sublane,128)-aligned 2D
    # buffer.  The padded buffer is a temporary, so aliasing the output onto it
    # is safe (no defensive copy) and avoids an extra HBM allocation.
    lanes = _PAD_LANES
    rows = _round_up(pl.cdiv(total, lanes), sublane)
    tile_rows = _pick_tile_rows(rows, lanes, itemsize, sublane)
    padded_rows = _round_up(rows, tile_rows)
    flat = jnp.pad(x.reshape(-1), (0, padded_rows * lanes - total))
    out2d = _call_pallas(flat.reshape(padded_rows, lanes), tile_rows, lanes, {0: 0})
    return out2d.reshape(-1)[:total].reshape(orig_shape)


# TODO(synk): the surrounding Trans_Refine graph (3x3/1x1 convs, BatchNorm,
# adaptive pooling, CFM/ConvMlp) is left to XLA; only the hard-swish
# activation is hand-written as a Pallas kernel here.


def _ref_hard_swish(x):
    return x * (jnp.clip(x + 3.0, 0.0, 6.0) / 6.0)


if __name__ == "__main__":
    key = jax.random.PRNGKey(0)
    k1, k2 = jax.random.split(key)

    # Small NCHW input consistent with how swish is used inside DAHNET's CoordAtt.
    x = jax.random.normal(k1, (2, 4, 16, 16), dtype=jnp.float32) * 4.0
    out = hard_swish(x)
    jax.block_until_ready(out)
    assert out.shape == x.shape and out.dtype == x.dtype
    assert jnp.allclose(out, _ref_hard_swish(x), atol=1e-6), "mismatch (fast path)"

    # Odd-sized tensor exercises the pad fallback path.
    x_odd = jax.random.normal(k2, (3, 5, 7), dtype=jnp.float32) * 4.0
    out_odd = hard_swish(x_odd)
    jax.block_until_ready(out_odd)
    assert out_odd.shape == x_odd.shape and out_odd.dtype == x_odd.dtype
    assert jnp.allclose(out_odd, _ref_hard_swish(x_odd), atol=1e-6), "mismatch (pad path)"

    print("KERNEL_OK")
</pallas_src>

<mosaic_0001>
module attributes {stable_mosaic.version = 11 : i64} {
  func.func @_hard_swish_kernel(%arg0: i32, %arg1: memref<2x1024xf32, #tpu.memory_space<vmem>>, %arg2: memref<2x1024xf32, #tpu.memory_space<vmem>>) attributes {dimension_semantics = [#tpu.dimension_semantics<parallel>], iteration_bounds = array<i64: 1>, scalar_prefetch = 0 : i64, scratch_operands = 0 : i64, tpu.core_type = #tpu.core_type<tc>, window_params = [{transform_indices = @transform_0, window_bounds = array<i64: 2, 1024>}, {transform_indices = @transform_1, window_bounds = array<i64: 2, 1024>}]} {
    %c0 = arith.constant 0 : index
    %c0_0 = arith.constant 0 : index
    %0 = vector.load %arg1[%c0, %c0_0] : memref<2x1024xf32, #tpu.memory_space<vmem>>, vector<2x1024xf32>
    %cst = arith.constant 3.000000e+00 : f32
    %1 = vector.broadcast %cst : f32 to vector<2x1024xf32>
    %2 = arith.addf %0, %1 : vector<2x1024xf32>
    %cst_1 = arith.constant 0.000000e+00 : f32
    %cst_2 = arith.constant 6.000000e+00 : f32
    %3 = vector.broadcast %cst_1 : f32 to vector<2x1024xf32>
    %4 = arith.maximumf %3, %2 : vector<2x1024xf32>
    %5 = vector.broadcast %cst_2 : f32 to vector<2x1024xf32>
    %6 = arith.minimumf %5, %4 : vector<2x1024xf32>
    %cst_3 = arith.constant 0.166666672 : f32
    %7 = vector.broadcast %cst_3 : f32 to vector<2x1024xf32>
    %8 = arith.mulf %6, %7 : vector<2x1024xf32>
    %9 = arith.mulf %0, %8 : vector<2x1024xf32>
    %c0_4 = arith.constant 0 : index
    %c0_5 = arith.constant 0 : index
    %10 = vector.load %arg2[%c0_4, %c0_5] : memref<2x1024xf32, #tpu.memory_space<vmem>>, vector<2x1024xf32>
    tpu.vector_store %arg2[%c0_4, %c0_5], %9 {strides = array<i32>} : memref<2x1024xf32, #tpu.memory_space<vmem>>, vector<2x1024xf32>,
    return
  }
  func.func @transform_0(%arg0: i32) -> (i32, i32) {
    %c0_i32 = arith.constant 0 : i32
    %c0_i32_0 = arith.constant 0 : i32
    return %arg0, %c0_i32 : i32, i32
  }
  func.func @transform_1(%arg0: i32) -> (i32, i32) {
    %c0_i32 = arith.constant 0 : i32
    %c0_i32_0 = arith.constant 0 : i32
    return %arg0, %c0_i32 : i32, i32
  }
}

</mosaic_0001>

<llo_original>
// kernel: hard_swish.1
$region0: #{hard_swish.1}
  #allocation0 [shape = 'u32[]', space=smem, size = 0x4, offset = 0x4, fixed_abs, tag = 'smem constant byte address 0x4 - core index']
  #allocation1 [shape = 'u32[144,128]{1,0:T(1,128)}', space=vmem, size = 0x12000, scoped, tag = 'internal scratch']
  %s0 = inlined_call_operand.vmem [shape: f32[2,1024], index: 0, kind: input, shape index: {}]
  %s1 = inlined_call_operand.vmem [shape: f32[2,1024], index: 1, kind: output, shape index: {}]
  %s2 = sld [smem:[#allocation0]]
  $region14: #{hard_swish.1} parent=0
    _
  %s4 = ssub.s32 1, %s2
  %s5 = scalar_select 0, %s4, %s2
  // Predicated region
  $region2: #{hard_swish.1} parent=0 // pred_check
    _
  $region3: #{hard_swish.1} parent=0 // pred_check_branch
    %7 = sbr.rel (0) target = $region5
  $region4: #{hard_swish.1} parent=0 // pred_region
    _
  $region5: #{hard_swish.1} parent=0 // pred_fallthru
    _
  %v8 = vld [vmem:[%s0] sm:$0xff]
  %v9 = vld [vmem:[%s0 + $0x8] sm:$0xff]
  %v10 = vadd.f32 %v8, 3.0
  %v11 = vadd.f32 %v9, 3.0
  %v12 = vmax.f32 %v10, 0.0
  %v13 = vmax.f32 %v11, 0.0
  %v14 = vmin.f32 %v12, 6.0
  %v15 = vmin.f32 %v13, 6.0
  %v16 = vmul.f32 %v14, 0.16666667
  %v17 = vmul.f32 %v15, 0.16666667
  %v18 = vmul.f32 %v8, %v16
  %v19 = vmul.f32 %v9, %v17
  %20 = vst [vmem:[%s1] sm:$0xff] %v18
  %21 = vst [vmem:[%s1 + $0x8] sm:$0xff] %v19
  // Predicated region
  $region6: #{hard_swish.1} parent=0 // pred_check
    _
  $region7: #{hard_swish.1} parent=0 // pred_check_branch
    %23 = sbr.rel (0) target = $region9
  $region8: #{hard_swish.1} parent=0 // pred_region
    _
  $region9: #{hard_swish.1} parent=0 // pred_fallthru
    _
  // Predicated region
  $region10: #{hard_swish.1} parent=0 // pred_check
    _
  $region11: #{hard_swish.1} parent=0 // pred_check_branch
    %25 = sbr.rel (0) target = $region13
  $region12: #{hard_swish.1} parent=0 // pred_region
    _
  $region13: #{hard_swish.1} parent=0 // pred_fallthru
    _

</llo_original>
